<compile_context>
chip_gen: v5e
topology: v5e:2x2
jax: 0.10.0
libtpu: 0.0.40
codegen_flags: <defaults>
</compile_context>

<pallas_src>
import jax
import jax.numpy as jnp
from jax.experimental import pallas as pl
from jax.experimental.pallas import tpu as pltpu

_LANE = 128
_SUBLANE = 8


def _round_up(n, m):
    return ((n + m - 1) // m) * m


def _cdiv(a, b):
    return -(-a // b)


# ----------------------------------------------------------------------------
# Pallas kernel: single fused dual-head linear (critic ++ option-policy)
# ----------------------------------------------------------------------------
def _ocpg_fused_kernel(x_ref, w_ref, b_ref, out_ref):
    # x_ref : (TM, D)        batch tile (f32 or bf16)
    # w_ref : (D, O_pad)     fused, lane-padded weights  [Wc | Wp | 0-pad]
    # b_ref : (1, O_pad)     fused, lane-padded bias (f32)
    # out   : (TM, O_pad)    lane-dense output tile
    acc = jnp.dot(x_ref[...], w_ref[...], preferred_element_type=jnp.float32)
    out_ref[...] = (acc + b_ref[...]).astype(out_ref.dtype)


# ----------------------------------------------------------------------------
# One-time parameter preparation (hoisted out of the per-call path)
# ----------------------------------------------------------------------------
def prepare_ocpg_params(wc, bc, wp, bp, *, compute_dtype=None):
    """Fuse + lane-pad the two heads once.  wc/wp: (D, O) (transposed torch Linear)."""
    D, O = wc.shape
    o_fused = 2 * O
    o_pad = _round_up(max(o_fused, _LANE), _LANE)
    w = jnp.concatenate([wc, wp], axis=1)                        # (D, 2O)
    w = jnp.pad(w, ((0, 0), (0, o_pad - o_fused)))               # (D, O_pad)
    b = jnp.concatenate([bc, bp], axis=0).reshape(1, o_fused)
    b = jnp.pad(b, ((0, 0), (0, o_pad - o_fused)))               # (1, O_pad)
    if compute_dtype is not None:
        w = w.astype(compute_dtype)
    return w, b.astype(jnp.float32), O


# ----------------------------------------------------------------------------
# Adaptive batch tiling
# ----------------------------------------------------------------------------
def _choose_tiling(B, D, o_pad, in_itemsize, out_itemsize, w_itemsize,
                   target_step_bytes, vmem_budget):
    B8 = _round_up(B, _SUBLANE)
    bytes_per_row = D * in_itemsize + o_pad * out_itemsize
    tm_target = max(_SUBLANE, target_step_bytes // max(1, bytes_per_row))
    tm_target = min(_round_up(tm_target, _SUBLANE), B8)
    n_tiles = max(1, _cdiv(B, tm_target))
    # Give v7x's two TensorCores work whenever the batch allows it; on 1-TC
    # chips (v5e/v6e) the extra grid step is ~0.35us, noise at this tile size.
    if n_tiles == 1 and B8 >= 2 * _SUBLANE:
        n_tiles = 2
    tm = _round_up(_cdiv(B, n_tiles), _SUBLANE)

    def working_set(t):
        # double-buffered x & out tiles + single-buffered (Buffered(1)) W, b
        return (2 * t * D * in_itemsize + 2 * t * o_pad * out_itemsize
                + D * o_pad * w_itemsize + o_pad * 4)

    while tm > _SUBLANE and working_set(tm) > vmem_budget:
        n_tiles += 1
        tm = _round_up(_cdiv(B, n_tiles), _SUBLANE)

    b_pad = _round_up(B, tm)
    n_tiles = b_pad // tm
    return tm, b_pad, n_tiles, working_set(tm)


# ----------------------------------------------------------------------------
# Wrapper: OCPGModel.forward
# ----------------------------------------------------------------------------
def ocpg_forward(inputs, params, *, out_dtype=None, return_padded=False,
                 target_step_bytes=8 << 20, vmem_budget=24 << 20):
    """Pallas implementation of OCPGModel.forward.

    inputs : any shape whose total size is a multiple of num_inputs
             (flattened like inputs.view(-1, num_inputs)).
    params : (w_fused, b_fused, num_options) from prepare_ocpg_params().
    Returns (critic, optionpolicy) each (B, num_options), or the padded fused
    slab (B_pad, O_pad) when return_padded=True.
    """
    w_fused, b_fused, num_options = params
    D, o_pad = w_fused.shape
    x = inputs.reshape(-1, D)
    B = x.shape[0]
    if x.dtype != w_fused.dtype:
        # Match operand dtypes (e.g. bf16 compute path).  This cast is only a
        # net win when the producer already emits that dtype; otherwise prefer
        # f32 params and use out_dtype to cut the writeback instead.
        x = x.astype(w_fused.dtype)
    out_dtype = x.dtype if out_dtype is None else out_dtype

    in_itemsize = jnp.dtype(x.dtype).itemsize
    w_itemsize = jnp.dtype(w_fused.dtype).itemsize
    out_itemsize = jnp.dtype(out_dtype).itemsize

    TM, B_pad, n_tiles, ws = _choose_tiling(
        B, D, o_pad, in_itemsize, out_itemsize, w_itemsize,
        target_step_bytes, vmem_budget)
    if B_pad != B:
        x = jnp.pad(x, ((0, B_pad - B), (0, 0)))

    grid_spec = pl.GridSpec(
        grid=(n_tiles,),
        in_specs=[
            pl.BlockSpec((TM, D), lambda i: (i, 0)),                 # x: batch-tiled
            pl.BlockSpec((D, o_pad), lambda i: (0, 0),
                         pipeline_mode=pl.Buffered(1)),              # W: grid-invariant
            pl.BlockSpec((1, o_pad), lambda i: (0, 0),
                         pipeline_mode=pl.Buffered(1)),              # b: grid-invariant
        ],
        out_specs=pl.BlockSpec((TM, o_pad), lambda i: (i, 0)),
    )

    cost = pl.CostEstimate(
        flops=2 * B_pad * D * o_pad,
        transcendentals=0,
        bytes_accessed=(B_pad * D * in_itemsize
                        + D * o_pad * w_itemsize
                        + o_pad * 4
                        + B_pad * o_pad * out_itemsize),
    )

    # Explicit scoped-VMEM limit: comfortably above the working set, safe on
    # v5e (16 MiB default) and within v7x's 32 MiB default / 64 MiB physical.
    vmem_limit = int(min(max(ws + (4 << 20), 16 << 20), 32 << 20))

    fused_out = pl.pallas_call(
        _ocpg_fused_kernel,
        out_shape=jax.ShapeDtypeStruct((B_pad, o_pad), out_dtype),
        grid_spec=grid_spec,
        compiler_params=pltpu.CompilerParams(
            dimension_semantics=("parallel",),
            vmem_limit_bytes=vmem_limit),
        cost_estimate=cost,
    )(x, w_fused, b_fused)

    if return_padded:
        # Lane-dense fused slab: rows [:B], cols [:O] = critic, [O:2O] = policy.
        return fused_out
    critic = fused_out[:B, :num_options]
    policy = fused_out[:B, num_options:2 * num_options]
    return critic, policy


# ----------------------------------------------------------------------------
# Deterministic parameter init (mimics norm_col_init used by the module)
# ----------------------------------------------------------------------------
def norm_col_init(key, shape, std=1.0, dtype=jnp.float32):
    # shape = (out_features, in_features), PyTorch convention
    w = jax.random.normal(key, shape, dtype)
    w = w * std / jnp.sqrt(jnp.sum(jnp.square(w), axis=1, keepdims=True))
    return w


if __name__ == "__main__":
    key = jax.random.PRNGKey(0)
    k_in, k_in2, k_wc, k_wp = jax.random.split(key, 4)

    num_inputs = 32
    num_options = 8

    # critic_linear: norm_col_init(std=1.0), bias=0 ; optionpolicy: std=0.01, bias=0
    wc_torch = norm_col_init(k_wc, (num_options, num_inputs), std=1.0)
    wp_torch = norm_col_init(k_wp, (num_options, num_inputs), std=0.01)
    bc = jnp.zeros((num_options,), jnp.float32)
    bp = jnp.zeros((num_options,), jnp.float32)
    wc, wp = wc_torch.T, wp_torch.T          # kernel layout: (in, out)

    # ---- hoisted one-time parameter prep (f32 and bf16 variants) -----------
    params_f32 = prepare_ocpg_params(wc, bc, wp, bp)
    params_bf16 = prepare_ocpg_params(wc, bc, wp, bp, compute_dtype=jnp.bfloat16)

    # ---- small case matching the module: inputs (2,4,32) -> x (8,32) -------
    inputs = jax.random.normal(k_in, (2, 4, num_inputs), jnp.float32)
    critic, policy = ocpg_forward(inputs, params_f32)
    critic = jax.block_until_ready(critic)
    policy = jax.block_until_ready(policy)

    x = inputs.reshape(-1, num_inputs)
    assert critic.shape == (8, num_options) and policy.shape == (8, num_options)
    assert jnp.allclose(critic, x @ wc + bc, atol=1e-5, rtol=1e-5)
    assert jnp.allclose(policy, x @ wp + bp, atol=1e-5, rtol=1e-5)

    # ---- larger batch exercising adaptive / even tiling + >=2 tiles --------
    inputs2 = jax.random.normal(k_in2, (40, 5, num_inputs), jnp.float32)
    critic2, policy2 = ocpg_forward(inputs2, params_f32)
    critic2 = jax.block_until_ready(critic2)
    policy2 = jax.block_until_ready(policy2)
    x2 = inputs2.reshape(-1, num_inputs)
    assert critic2.shape == (200, num_options)
    assert jnp.allclose(critic2, x2 @ wc + bc, atol=1e-5, rtol=1e-5)
    assert jnp.allclose(policy2, x2 @ wp + bp, atol=1e-5, rtol=1e-5)

    # ---- bf16 operands + bf16 writeback + padded-slab output ---------------
    fused_bf = ocpg_forward(inputs2, params_bf16, out_dtype=jnp.bfloat16,
                            return_padded=True)
    fused_bf = jax.block_until_ready(fused_bf)
    x2b = x2.astype(jnp.bfloat16).astype(jnp.float32)
    wcb = wc.astype(jnp.bfloat16).astype(jnp.float32)
    wpb = wp.astype(jnp.bfloat16).astype(jnp.float32)
    critic_bf = fused_bf[:200, :num_options].astype(jnp.float32)
    policy_bf = fused_bf[:200, num_options:2 * num_options].astype(jnp.float32)
    assert jnp.allclose(critic_bf, x2b @ wcb + bc, atol=2e-2, rtol=2e-2)
    assert jnp.allclose(policy_bf, x2b @ wpb + bp, atol=2e-2, rtol=2e-2)

    # TODO(synk): getTermination / getAction (per-option Linear + sigmoid) are
    # not part of forward(); they could be fused as extra padded lanes of the
    # same (D, O_pad) weight slab if needed.

    print("KERNEL_OK")
</pallas_src>

<mosaic_0001>
module attributes {stable_mosaic.version = 11 : i64} {
  func.func @_ocpg_fused_kernel(%arg0: i32, %arg1: memref<8x32xf32, #tpu.memory_space<vmem>>, %arg2: memref<32x128xf32, #tpu.memory_space<vmem>>, %arg3: memref<1x128xf32, #tpu.memory_space<vmem>>, %arg4: memref<8x128xf32, #tpu.memory_space<vmem>>) attributes {dimension_semantics = [#tpu.dimension_semantics<parallel>], iteration_bounds = array<i64: 1>, scalar_prefetch = 0 : i64, scratch_operands = 0 : i64, tpu.core_type = #tpu.core_type<tc>, window_params = [{transform_indices = @transform_0, window_bounds = array<i64: 8, 32>}, {pipeline_mode = #tpu.pipeline_mode<synchronous>, transform_indices = @transform_1, window_bounds = array<i64: 32, 128>}, {pipeline_mode = #tpu.pipeline_mode<synchronous>, transform_indices = @transform_2, window_bounds = array<i64: 1, 128>}, {transform_indices = @transform_3, window_bounds = array<i64: 8, 128>}]} {
    %c0 = arith.constant 0 : index
    %c0_0 = arith.constant 0 : index
    %0 = vector.load %arg1[%c0, %c0_0] : memref<8x32xf32, #tpu.memory_space<vmem>>, vector<8x32xf32>
    %c0_1 = arith.constant 0 : index
    %c0_2 = arith.constant 0 : index
    %1 = vector.load %arg2[%c0_1, %c0_2] : memref<32x128xf32, #tpu.memory_space<vmem>>, vector<32x128xf32>
    %cst = arith.constant dense<0.000000e+00> : vector<8x128xf32>
    %2 = tpu.matmul %0, %1, %cst {dimension_numbers = #tpu.dot_dimension_numbers<[1], [0], [0], [1], [0, 0, 1, 1], [], []>} : vector<8x32xf32>, vector<32x128xf32>, vector<8x128xf32> -> vector<8x128xf32>
    %c0_3 = arith.constant 0 : index
    %c0_4 = arith.constant 0 : index
    %3 = vector.load %arg3[%c0_3, %c0_4] : memref<1x128xf32, #tpu.memory_space<vmem>>, vector<1x128xf32>
    %4 = vector.broadcast %3 : vector<1x128xf32> to vector<8x128xf32>
    %5 = arith.addf %2, %4 : vector<8x128xf32>
    %c0_5 = arith.constant 0 : index
    %c0_6 = arith.constant 0 : index
    %6 = vector.load %arg4[%c0_5, %c0_6] : memref<8x128xf32, #tpu.memory_space<vmem>>, vector<8x128xf32>
    tpu.vector_store %arg4[%c0_5, %c0_6], %5 {strides = array<i32>} : memref<8x128xf32, #tpu.memory_space<vmem>>, vector<8x128xf32>,
    return
  }
  func.func @transform_0(%arg0: i32) -> (i32, i32) {
    %c0_i32 = arith.constant 0 : i32
    %c0_i32_0 = arith.constant 0 : i32
    return %arg0, %c0_i32 : i32, i32
  }
  func.func @transform_1(%arg0: i32) -> (i32, i32) {
    %c0_i32 = arith.constant 0 : i32
    %c0_i32_0 = arith.constant 0 : i32
    %c0_i32_1 = arith.constant 0 : i32
    return %c0_i32, %c0_i32_0 : i32, i32
  }
  func.func @transform_2(%arg0: i32) -> (i32, i32) {
    %c0_i32 = arith.constant 0 : i32
    %c0_i32_0 = arith.constant 0 : i32
    %c0_i32_1 = arith.constant 0 : i32
    return %c0_i32, %c0_i32_0 : i32, i32
  }
  func.func @transform_3(%arg0: i32) -> (i32, i32) {
    %c0_i32 = arith.constant 0 : i32
    %c0_i32_0 = arith.constant 0 : i32
    return %arg0, %c0_i32 : i32, i32
  }
}

</mosaic_0001>

<llo_original>
// kernel: tpu_custom_call.1
$region0: #{tpu_custom_call.1}
  #allocation0 [shape = 'u32[]', space=smem, size = 0x4, offset = 0x4, fixed_abs, tag = 'smem constant byte address 0x4 - core index']
  #allocation1 [shape = 'u32[72,128]{1,0:T(1,128)}', space=vmem, size = 0x9000, scoped, tag = 'internal scratch']
  %s0 = inlined_call_operand.hbm [shape: f32[8,32], index: 0, kind: input, shape index: {}]
  %s1 = inlined_call_operand.hbm [shape: f32[32,128], index: 1, kind: input, shape index: {}]
  %s2 = inlined_call_operand.vmem [shape: f32[1,128], index: 2, kind: input, shape index: {}]
  %s3 = inlined_call_operand.hbm [shape: f32[8,128], index: 3, kind: output, shape index: {}]
  %s4 = sld [smem:[#allocation0]]
  $region30: #{tpu_custom_call.1} parent=0
    _
  %s6 = ssub.s32 1, %s4
  %s7 = scalar_select 0, %s6, %s4
  $region1: #{tpu_custom_call.1} parent=0
    #allocation2 [shape = 'u8[4096]{0}', space=vmem, size = 0x1000, scoped, tag = 'input window, operand 0, single buffered']
    #allocation3 [shape = 's32[1]{0}', space=sflag, size = 0x4, scoped, tag = 'scoped memory for tpu_custom_call.1']
    #allocation4 [shape = 's32[1]{0}', space=sflag, size = 0x4, scoped, tag = 'scoped memory for tpu_custom_call.1']
    #allocation5 [shape = 'u8[16384]{0}', space=vmem, size = 0x4000, scoped, tag = 'input window, operand 1, single buffered']
    #allocation6 [shape = 's32[1]{0}', space=sflag, size = 0x4, scoped, tag = 'scoped memory for tpu_custom_call.1']
    #allocation7 [shape = 'u8[4096]{0}', space=vmem, size = 0x1000, scoped, tag = 'output window, operand 0, single buffered']
    %8 = vsyncpa [#allocation3], 0
    %9 = vsyncpa [#allocation6], 0
    %10 = vsyncpa [#allocation4], 0
    // Predicated region
    $region2: #{tpu_custom_call.1} parent=1 // pred_check
      _
    $region3: #{tpu_custom_call.1} parent=1 // pred_check_branch
      %12 = sbr.rel (0) target = $region5
    $region4: #{tpu_custom_call.1} parent=1 // pred_region
      %14 = vsyncadd [#allocation3], 0
      %s16 = sshll.u32 %s0, 4
      %s17 = int_to_ptr.hbm [resolvable:$true] %s16
      %s18 = sshll.u32 [#allocation2], 4
      %s19 = int_to_ptr.vmem [resolvable:$true] %s18
      %21 = dma.hbm_to_vmem [thread:$0]  %s17, 128, %s19, [#allocation3]
    $region5: #{tpu_custom_call.1} parent=1 // pred_fallthru
      _
    // Predicated region
    $region6: #{tpu_custom_call.1} parent=1 // pred_check
      _
    $region7: #{tpu_custom_call.1} parent=1 // pred_check_branch
      %23 = sbr.rel (0) target = $region9
    $region8: #{tpu_custom_call.1} parent=1 // pred_region
      %25 = vsyncadd [#allocation6], 0
      %s26 = sshll.u32 %s1, 4
      %s27 = int_to_ptr.hbm [resolvable:$true] %s26
      %s28 = sshll.u32 [#allocation5], 4
      %s29 = int_to_ptr.vmem [resolvable:$true] %s28
      %34 = dma.hbm_to_vmem [thread:$0]  %s27, 512, %s29, [#allocation6], 128, 128, 8
    $region9: #{tpu_custom_call.1} parent=1 // pred_fallthru
      _
    // Predicated region
    $region10: #{tpu_custom_call.1} parent=1 // pred_check
      _
    $region11: #{tpu_custom_call.1} parent=1 // pred_check_branch
      %36 = sbr.rel (0) target = $region13
    $region12: #{tpu_custom_call.1} parent=1 // pred_region
      _
    $region13: #{tpu_custom_call.1} parent=1 // pred_fallthru
      _
    // Predicated region
    $region14: #{tpu_custom_call.1} parent=1 // pred_check
      _
    $region15: #{tpu_custom_call.1} parent=1 // pred_check_branch
      %38 = sbr.rel (0) target = $region17
    $region16: #{tpu_custom_call.1} parent=1 // pred_region
      %40 = dma.done [#allocation3], 128
    $region17: #{tpu_custom_call.1} parent=1 // pred_fallthru
      _
    // Predicated region
    $region18: #{tpu_custom_call.1} parent=1 // pred_check
      _
    $region19: #{tpu_custom_call.1} parent=1 // pred_check_branch
      %42 = sbr.rel (0) target = $region21
    $region20: #{tpu_custom_call.1} parent=1 // pred_region
      %44 = dma.done [#allocation6], 512
    $region21: #{tpu_custom_call.1} parent=1 // pred_fallthru
      _
    %v45 = vld [vmem:[#allocation2] sm:$0xff]
    %v46 = vld [vmem:[#allocation5] sm:$0xff]
    %v47 = vld [vmem:[#allocation5 + $0x8] sm:$0xff]
    %v48 = vld [vmem:[#allocation5 + $0x10] sm:$0xff]
    %v49 = vld [vmem:[#allocation5 + $0x18] sm:$0xff]
    %v50 = vld [vmem:[%s2] sm:$0x1]
    %v52 = vperm.slane %v50, 0
    %vm54 = vcmask 261120
    %v56 = vsel %vm54, %v45, 0
    %58 = vmatpush.msra.mxu0 0.0
    %59 = vmatpush.msra.mxu0 0.0
    %60 = vmatpush.msra.mxu0 0.0
    %61 = vmatpush.msra.mxu0 0.0
    %62 = vmatpush.msra.mxu0 0.0
    %63 = vmatpush.msra.mxu0 0.0
    %64 = vmatpush.msra.mxu0 0.0
    %65 = vmatpush.msra.mxu0 0.0
    %66 = vmatpush.msra.mxu0 0.0
    %67 = vmatpush.msra.mxu0 0.0
    %68 = vmatpush.msra.mxu0 0.0
    %69 = vmatpush.msra.mxu0 0.0
    %70 = vmatpush.msra.mxu0 %v49
    %71 = vmatpush.msra.mxu0 %v48
    %72 = vmatpush.msra.mxu0 %v47
    %73 = vmatpush.msra.mxu0 %v46
    %74 = vmatmul.f32.gmra.mxu0 %v56
    %v75 = vpop.f32.mrf.mxu0
    %v76 = vadd.f32 %v52, %v75
    %77 = vdwg.mxu0
    %78 = vst [vmem:[#allocation7] sm:$0xff] %v76
    // Predicated region
    $region22: #{tpu_custom_call.1} parent=1 // pred_check
      _
    $region23: #{tpu_custom_call.1} parent=1 // pred_check_branch
      %80 = sbr.rel (0) target = $region25
    $region24: #{tpu_custom_call.1} parent=1 // pred_region
      %82 = vsyncadd [#allocation4], 0
      %s84 = sshll.u32 [#allocation7], 4
      %s85 = int_to_ptr.vmem [resolvable:$true] %s84
      %s86 = sshll.u32 %s3, 4
      %s87 = int_to_ptr.hbm [resolvable:$true] %s86
      %89 = dma.vmem_to_hbm [thread:$0]  %s85, 128, %s87, [#allocation4]
    $region25: #{tpu_custom_call.1} parent=1 // pred_fallthru
      _
    // Predicated region
    $region26: #{tpu_custom_call.1} parent=1 // pred_check
      _
    $region27: #{tpu_custom_call.1} parent=1 // pred_check_branch
      %91 = sbr.rel (0) target = $region29
    $region28: #{tpu_custom_call.1} parent=1 // pred_region
      %93 = dma.done [#allocation4], 128
    $region29: #{tpu_custom_call.1} parent=1 // pred_fallthru
      _
    %94 = vsyncpa [#allocation3], 1
    %95 = vsyncpa [#allocation6], 1
    %96 = vsyncpa [#allocation4], 1

</llo_original>
